<compile_context>
chip_gen: v5e
topology: v5e:2x2
jax: 0.10.0
libtpu: 0.0.40
codegen_flags: <defaults>
</compile_context>

<pallas_src>
import jax
import jax.numpy as jnp
from jax import lax
from jax.experimental import pallas as pl
from jax.experimental.pallas import tpu as pltpu


def _round_up(x, m):
    return (x + m - 1) // m * m


def _conv_bn_relu_kernel(cols_ref, w_ref, o_ref):
    # cols_ref: [K_pad, TN]        bf16 im2col columns (+ ones row for bias)
    # w_ref:    [C_out_pad, K_pad] bf16 BN-folded weights (bias in col C_in*9)
    # o_ref:    [C_out_pad, TN]    f32
    acc = jnp.dot(w_ref[...], cols_ref[...],
                  preferred_element_type=jnp.float32)        # MXU, f32 accumulate
    o_ref[...] = jnp.maximum(acc, 0.0).astype(o_ref.dtype)   # fused bias+BN+ReLU


def down_conv_forward(x, w, b, gamma, beta, running_mean, running_var, eps=1e-5):
    """Forward of down_conv: ReLU(BN(Conv2d(x, w, b, k=3, s=2, p=1)))."""
    B, C_in, H, W = x.shape
    C_out = w.shape[0]
    k, stride, pad = 3, 2, 1
    H_out = (H + 2 * pad - k) // stride + 1
    W_out = (W + 2 * pad - k) // stride + 1
    P = H_out * W_out
    N = B * P                                    # batch collapsed into lanes

    # ---- Fold BatchNorm (inference / running stats) into conv weight & bias,
    #      in f32, BEFORE any bf16 cast.
    s = (gamma / jnp.sqrt(running_var + eps)).astype(jnp.float32)     # [C_out]
    w_eff = w.astype(jnp.float32) * s[:, None, None, None]            # [C_out,C_in,3,3]
    b_eff = (b.astype(jnp.float32) - running_mean) * s + beta         # [C_out]

    # ---- im2col (layout plumbing). allow_input_fusion lets XLA fuse this
    #      producer chain into the kernel's input DMA.
    x_pad = jnp.pad(x.astype(jnp.float32),
                    ((0, 0), (0, 0), (pad, pad), (pad, pad)))
    taps = []
    for i in range(k):
        for j in range(k):
            taps.append(
                lax.slice(
                    x_pad,
                    (0, 0, i, j),
                    (B, C_in, i + stride * (H_out - 1) + 1,
                     j + stride * (W_out - 1) + 1),
                    (1, 1, stride, stride),
                ))                                   # each: [B, C_in, H_out, W_out]
    cols = jnp.stack(taps, axis=2)                   # [B, C_in, 9, H_out, W_out]
    cols = cols.transpose(1, 2, 0, 3, 4)             # [C_in, 9, B, H_out, W_out]
    cols = cols.reshape(C_in * k * k, N)             # [C_in*9, B*P]
    cols = jnp.concatenate([cols, jnp.ones((1, N), cols.dtype)], axis=0)
    K = C_in * k * k + 1

    # ---- Padding to full tiles: K -> multiple of 16 (bf16 sublane packing),
    #      C_out -> multiple of 8, pixel axis -> multiple of the lane tile.
    K_pad = _round_up(K, 16)
    C_out_pad = _round_up(C_out, 8)

    # Lane-tile selection under a double-buffered VMEM budget (generation-safe:
    # well under v5e's 16MiB default scoped limit; we raise the limit to 32MiB).
    n128 = _round_up(N, 128)
    budget = 16 * 1024 * 1024
    TN = 128
    for cand in (2048, 1024, 512, 256, 128):
        if cand > n128:
            continue
        step_bytes = (2 * K_pad * cand * 2          # cols (bf16, double-buffered)
                      + 2 * C_out_pad * cand * 4    # out  (f32, double-buffered)
                      + 2 * C_out_pad * K_pad * 2)  # weights
        if step_bytes <= budget:
            TN = cand
            break
    N_pad = _round_up(N, TN)
    n_tiles = N_pad // TN

    cols = jnp.pad(cols, ((0, K_pad - K), (0, N_pad - N))).astype(jnp.bfloat16)

    w_flat = w_eff.reshape(C_out, C_in * k * k)
    w_aug = jnp.concatenate([w_flat, b_eff[:, None]], axis=1)         # [C_out, K]
    w_aug = jnp.pad(w_aug, ((0, C_out_pad - C_out),
                            (0, K_pad - K))).astype(jnp.bfloat16)     # [C_out_pad, K_pad]

    cols_spec = pl.BlockSpec((K_pad, TN), lambda n: (0, n))
    if n_tiles >= 3:
        # Deep grid: 3-deep input pipelining hides DMA latency (weights stay
        # resident; their index_map is constant).
        cols_spec = pl.BlockSpec((K_pad, TN), lambda n: (0, n),
                                 pipeline_mode=pl.Buffered(3))

    cost = pl.CostEstimate(
        flops=int(2 * C_out_pad * K_pad * N_pad),
        transcendentals=0,
        bytes_accessed=int(cols.size * 2 + w_aug.size * 2 + C_out_pad * N_pad * 4),
    )

    out2 = pl.pallas_call(
        _conv_bn_relu_kernel,
        out_shape=jax.ShapeDtypeStruct((C_out_pad, N_pad), jnp.float32),
        grid=(n_tiles,),
        in_specs=[
            cols_spec,                                            # pixel tiles
            pl.BlockSpec((C_out_pad, K_pad), lambda n: (0, 0)),   # weights resident
        ],
        out_specs=pl.BlockSpec((C_out_pad, TN), lambda n: (0, n)),
        compiler_params=pltpu.CompilerParams(
            dimension_semantics=("parallel",),
            allow_input_fusion=[True, False],    # fuse im2col producer into DMA
            vmem_limit_bytes=32 * 1024 * 1024,
        ),
        cost_estimate=cost,
    )(cols, w_aug)

    out = out2[:C_out, :N].reshape(C_out, B, H_out, W_out)
    return out.transpose(1, 0, 2, 3)             # -> [B, C_out, H_out, W_out]


def _reference_module(x, w, b, gamma, beta, rm, rv, eps=1e-5):
    # Literal module semantics in f32: Conv2d(k=3,s=2,p=1)+bias, BN(running), ReLU.
    y = lax.conv_general_dilated(
        x, w, window_strides=(2, 2), padding=((1, 1), (1, 1)),
        dimension_numbers=("NCHW", "OIHW", "NCHW"))
    y = y + b[None, :, None, None]
    s = gamma / jnp.sqrt(rv + eps)
    y = (y - rm[None, :, None, None]) * s[None, :, None, None] + beta[None, :, None, None]
    return jnp.maximum(y, 0.0)


def _reference_bf16_folded(x, w, b, gamma, beta, rm, rv, eps=1e-5):
    # Mirrors the kernel's quantization: BN folded in f32, inputs/weights
    # rounded to bf16, conv accumulated in f32.
    s = gamma / jnp.sqrt(rv + eps)
    w_eff = (w * s[:, None, None, None]).astype(jnp.bfloat16).astype(jnp.float32)
    b_eff = ((b - rm) * s + beta).astype(jnp.bfloat16).astype(jnp.float32)
    xq = x.astype(jnp.bfloat16).astype(jnp.float32)
    y = lax.conv_general_dilated(
        xq, w_eff, window_strides=(2, 2), padding=((1, 1), (1, 1)),
        dimension_numbers=("NCHW", "OIHW", "NCHW"))
    y = y + b_eff[None, :, None, None]
    return jnp.maximum(y, 0.0)


if __name__ == "__main__":
    # Small shapes consistent with the module. H_out*W_out = 16*16 = 256, so the
    # collapsed lane dim is B*P = 512 (lane-dense, multiple of 128).
    B, C_in, C_out, H, W = 2, 4, 8, 32, 32

    key = jax.random.PRNGKey(0)
    kx, kw, kb, kg, kbe, km, kv = jax.random.split(key, 7)

    x = jax.random.normal(kx, (B, C_in, H, W), dtype=jnp.float32)

    bound = 1.0 / ((C_in * 9) ** 0.5)   # PyTorch Conv2d-like uniform init bound
    w = jax.random.uniform(kw, (C_out, C_in, 3, 3), jnp.float32, -bound, bound)
    b = jax.random.uniform(kb, (C_out,), jnp.float32, -bound, bound)

    gamma = jax.random.uniform(kg, (C_out,), jnp.float32, 0.5, 1.5)
    beta = jax.random.uniform(kbe, (C_out,), jnp.float32, -0.5, 0.5)
    running_mean = jax.random.normal(km, (C_out,), jnp.float32) * 0.1
    running_var = jax.random.uniform(kv, (C_out,), jnp.float32, 0.5, 1.5)

    fwd = jax.jit(down_conv_forward)   # single XLA computation -> input fusion possible
    out = jax.block_until_ready(
        fwd(x, w, b, gamma, beta, running_mean, running_var))

    assert out.shape == (B, C_out, H // 2, W // 2), out.shape

    ref_q = _reference_bf16_folded(x, w, b, gamma, beta, running_mean, running_var)
    ref_f = _reference_module(x, w, b, gamma, beta, running_mean, running_var)
    # Tight check vs. a reference with the same bf16 streaming quantization.
    assert jnp.allclose(out, ref_q, atol=5e-3, rtol=5e-3), "mismatch vs bf16-folded ref"
    # Looser check vs. the exact f32 module semantics (bounds the bf16 cast error).
    assert jnp.allclose(out, ref_f, atol=5e-2, rtol=5e-2), "mismatch vs f32 module ref"

    print("KERNEL_OK")
</pallas_src>

<mosaic_0001>
module attributes {stable_mosaic.version = 11 : i64} {
  func.func @_conv_bn_relu_kernel(%arg0: i32, %arg1: memref<48x512xbf16, #tpu.memory_space<vmem>>, %arg2: memref<8x48xbf16, #tpu.memory_space<vmem>>, %arg3: memref<8x512xf32, #tpu.memory_space<vmem>>) attributes {dimension_semantics = [#tpu.dimension_semantics<parallel>], iteration_bounds = array<i64: 1>, scalar_prefetch = 0 : i64, scratch_operands = 0 : i64, tpu.core_type = #tpu.core_type<tc>, window_params = [{transform_indices = @transform_0, window_bounds = array<i64: 48, 512>}, {pipeline_mode = #tpu.pipeline_mode<synchronous>, transform_indices = @transform_1, window_bounds = array<i64: 8, 48>}, {transform_indices = @transform_2, window_bounds = array<i64: 8, 512>}]} {
    %c0 = arith.constant 0 : index
    %c0_0 = arith.constant 0 : index
    %0 = vector.load %arg2[%c0, %c0_0] : memref<8x48xbf16, #tpu.memory_space<vmem>>, vector<8x48xbf16>
    %c0_1 = arith.constant 0 : index
    %c0_2 = arith.constant 0 : index
    %1 = vector.load %arg1[%c0_1, %c0_2] : memref<48x512xbf16, #tpu.memory_space<vmem>>, vector<48x512xbf16>
    %cst = arith.constant dense<0.000000e+00> : vector<8x512xf32>
    %2 = tpu.matmul %0, %1, %cst {dimension_numbers = #tpu.dot_dimension_numbers<[1], [0], [0], [1], [0, 0, 1, 1], [], []>} : vector<8x48xbf16>, vector<48x512xbf16>, vector<8x512xf32> -> vector<8x512xf32>
    %cst_3 = arith.constant 0.000000e+00 : f32
    %3 = vector.broadcast %cst_3 : f32 to vector<8x512xf32>
    %4 = arith.maximumf %2, %3 : vector<8x512xf32>
    %c0_4 = arith.constant 0 : index
    %c0_5 = arith.constant 0 : index
    %5 = vector.load %arg3[%c0_4, %c0_5] : memref<8x512xf32, #tpu.memory_space<vmem>>, vector<8x512xf32>
    tpu.vector_store %arg3[%c0_4, %c0_5], %4 {strides = array<i32>} : memref<8x512xf32, #tpu.memory_space<vmem>>, vector<8x512xf32>,
    return
  }
  func.func @transform_0(%arg0: i32) -> (i32, i32) {
    %c0_i32 = arith.constant 0 : i32
    %c0_i32_0 = arith.constant 0 : i32
    return %c0_i32, %arg0 : i32, i32
  }
  func.func @transform_1(%arg0: i32) -> (i32, i32) {
    %c0_i32 = arith.constant 0 : i32
    %c0_i32_0 = arith.constant 0 : i32
    %c0_i32_1 = arith.constant 0 : i32
    return %c0_i32, %c0_i32_0 : i32, i32
  }
  func.func @transform_2(%arg0: i32) -> (i32, i32) {
    %c0_i32 = arith.constant 0 : i32
    %c0_i32_0 = arith.constant 0 : i32
    return %c0_i32, %arg0 : i32, i32
  }
}

</mosaic_0001>

<llo_original>
// kernel: down_conv_forward.2
$region0: #{down_conv_forward.2}
  #allocation0 [shape = 'u32[]', space=smem, size = 0x4, offset = 0x4, fixed_abs, tag = 'smem constant byte address 0x4 - core index']
  #allocation1 [shape = 'u32[72,128]{1,0:T(1,128)}', space=vmem, size = 0x9000, scoped, tag = 'internal scratch']
  #allocation2 [shape = 'u32[2048]{0}', space=vmem, size = 0x2000, scoped, tag = 'scoped memory for down_conv_forward.2']
  #allocation3 [shape = 'u32[2048]{0}', space=vmem, size = 0x2000, scoped, tag = 'scoped memory for down_conv_forward.2']
  #allocation4 [shape = 'u32[2048]{0}', space=vmem, size = 0x2000, scoped, tag = 'scoped memory for down_conv_forward.2']
  #allocation5 [shape = 'u32[2048]{0}', space=vmem, size = 0x2000, scoped, tag = 'scoped memory for down_conv_forward.2']
  #allocation6 [shape = 'u32[2048]{0}', space=vmem, size = 0x2000, scoped, tag = 'scoped memory for down_conv_forward.2']
  %s0 = inlined_call_operand.vmem [shape: bf16[8,48], index: 0, kind: input, shape index: {}]
  %s1 = inlined_call_operand.<no memory space> [shape: s32[], index: 1, kind: input, shape index: {}]
  %s2 = inlined_call_operand.vmem [shape: bf16[36,512], index: 2, kind: input, shape index: {}]
  %s3 = inlined_call_operand.<no memory space> [shape: bf16[], index: 3, kind: input, shape index: {}]
  %s4 = inlined_call_operand.<no memory space> [shape: bf16[], index: 4, kind: input, shape index: {}]
  %s5 = inlined_call_operand.vmem [shape: f32[8,512], index: 5, kind: output, shape index: {}]
  %s6 = sld [smem:[#allocation0]]
  $region18: #{down_conv_forward.2} parent=0
    _
  %s8 = ssub.s32 1, %s6
  %s9 = scalar_select 0, %s8, %s6
  %v10 = vstv %s1
  %v11 = vstv %s3
  %v12 = vunpack.i.l.bf16 %v11
  %v14 = vunpack.i.h.bf16 %v11
  %v16 = vstv %s4
  %v17 = vunpack.i.l.bf16 %v16
  %v19 = vunpack.i.h.bf16 %v16
  $region1: #{down_conv_forward.2} parent=0
    #allocation7 [shape = 'u8[49152]{0}', space=vmem, size = 0xc000, dematerialized = true, scoped, tag = 'FusionAdapter Buffer %fusion.2 = bf16[48,512]{1,0:T(8,128)(2,1)} fusion(%param_1.29, %param_2.26, %param_3.21, %param_4.1), kind=kLoop, calls=%fused_computation.3.clone.clone, metadata={op_name="jit(down_conv_forward)/jit(_pad)/pad" stack_frame_id=21}']
    // Predicated region
    $region2: #{down_conv_forward.2} parent=1 // pred_check
      _
    $region3: #{down_conv_forward.2} parent=1 // pred_check_branch
      %22 = sbr.rel (0) target = $region5
    $region4: #{down_conv_forward.2} parent=1 // pred_region
      _
    $region5: #{down_conv_forward.2} parent=1 // pred_fallthru
      _
    // Predicated region
    $region6: #{down_conv_forward.2} parent=1 // pred_check
      _
    $region7: #{down_conv_forward.2} parent=1 // pred_check_branch
      %24 = sbr.rel (0) target = $region9
    $region8: #{down_conv_forward.2} parent=1 // pred_region
      _
    $region9: #{down_conv_forward.2} parent=1 // pred_fallthru
      _
    %v25 = vld [vmem:[%s2] sm:$0xf]
    %v26 = vunpack.c.l.bf16 %v25
    %v27 = vunpack.c.h.bf16 %v25
    %v28 = vlaneseq
    %v29 = vshrl.u32 %v28, 7
    %vm31 = vcmp.lt.s32.totalorder %v29, 36
    %v32 = vsel %vm31, %v26, %v12
    %v33 = vlaneseq
    %v34 = vshrl.u32 %v33, 7
    %37 = xla_tuple %v34, %v10
    %38 = xla_tuple %37
    %vm39 = vcmp.lt.s32.totalorder %v34, %v10
    %v40 = vsel %vm39, 1, 0
    %41 = xla_tuple %v40
    %42 = xla_tuple %v40, %v32, %v17
    %43 = xla_tuple %42
    %v44 = vsel %vm39, %v32, %v17
    %45 = xla_tuple %v44
    %v46 = vpack.c.bf16 0.0, %v44
    %s48 = ssub.s32 16, 1
    %49 = vst [vmem:[#allocation7] sm:%s48] %v46
    %s50 = scalar_lea.vmem %s2, 4
    %v51 = vld [vmem:[%s50] sm:$0xf]
    %v52 = vunpack.c.l.bf16 %v51
    %v53 = vunpack.c.h.bf16 %v51
    %v54 = vlaneseq
    %v55 = vshrl.u32 %v54, 7
    %vm57 = vcmp.lt.s32.totalorder %v55, 36
    %v58 = vsel %vm57, %v52, %v12
    %v59 = vlaneseq
    %v60 = vshrl.u32 %v59, 7
    %63 = xla_tuple %v60, %v10
    %64 = xla_tuple %63
    %vm65 = vcmp.lt.s32.totalorder %v60, %v10
    %v66 = vsel %vm65, 1, 0
    %67 = xla_tuple %v66
    %68 = xla_tuple %v66, %v58, %v17
    %69 = xla_tuple %68
    %v70 = vsel %vm65, %v58, %v17
    %71 = xla_tuple %v70
    %s72 = scalar_lea.vmem [#allocation7], 4
    %v73 = vpack.c.bf16 0.0, %v70
    %s75 = ssub.s32 16, 1
    %76 = vst [vmem:[%s72] sm:%s75] %v73
    %s77 = scalar_lea.vmem %s2, 8
    %v78 = vld [vmem:[%s77] sm:$0xf]
    %v79 = vunpack.c.l.bf16 %v78
    %v80 = vunpack.c.h.bf16 %v78
    %v81 = vlaneseq
    %v82 = vshrl.u32 %v81, 7
    %vm84 = vcmp.lt.s32.totalorder %v82, 36
    %v85 = vsel %vm84, %v79, %v12
    %v86 = vlaneseq
    %v87 = vshrl.u32 %v86, 7
    %90 = xla_tuple %v87, %v10
    %91 = xla_tuple %90
    %vm92 = vcmp.lt.s32.totalorder %v87, %v10
    %v93 = vsel %vm92, 1, 0
    %94 = xla_tuple %v93
    %95 = xla_tuple %v93, %v85, %v17
    %96 = xla_tuple %95
    %v97 = vsel %vm92, %v85, %v17
    %98 = xla_tuple %v97
    %s99 = scalar_lea.vmem [#allocation7], 8
    %v100 = vpack.c.bf16 0.0, %v97
    %s102 = ssub.s32 16, 1
    %103 = vst [vmem:[%s99] sm:%s102] %v100
    %s104 = scalar_lea.vmem %s2, 12
    %v105 = vld [vmem:[%s104] sm:$0xf]
    %v106 = vunpack.c.l.bf16 %v105
    %v107 = vunpack.c.h.bf16 %v105
    %v108 = vlaneseq
    %v109 = vshrl.u32 %v108, 7
    %vm111 = vcmp.lt.s32.totalorder %v109, 36
    %v112 = vsel %vm111, %v106, %v12
    %v113 = vlaneseq
    %v114 = vshrl.u32 %v113, 7
    %117 = xla_tuple %v114, %v10
    %118 = xla_tuple %117
    %vm119 = vcmp.lt.s32.totalorder %v114, %v10
    %v120 = vsel %vm119, 1, 0
    %121 = xla_tuple %v120
    %122 = xla_tuple %v120, %v112, %v17
    %123 = xla_tuple %122
    %v124 = vsel %vm119, %v112, %v17
    %125 = xla_tuple %v124
    %s126 = scalar_lea.vmem [#allocation7], 12
    %v127 = vpack.c.bf16 0.0, %v124
    %s129 = ssub.s32 16, 1
    %130 = vst [vmem:[%s126] sm:%s129] %v127
    %s131 = scalar_lea.vmem %s2, 16
    %v132 = vld [vmem:[%s131] sm:$0xf]
    %v133 = vunpack.c.l.bf16 %v132
    %v134 = vunpack.c.h.bf16 %v132
    %v135 = vlaneseq
    %v136 = vshrl.u32 %v135, 7
    %v137 = vadd.s32 %v136, 8
    %vm138 = vcmp.lt.s32.totalorder %v137, 36
    %v139 = vsel %vm138, %v133, %v12
    %v140 = vlaneseq
    %v141 = vshrl.u32 %v140, 7
    %v143 = vadd.s32 %v141, 8
    %144 = xla_tuple %v143, %v10
    %145 = xla_tuple %144
    %vm146 = vcmp.lt.s32.totalorder %v143, %v10
    %v147 = vsel %vm146, 1, 0
    %148 = xla_tuple %v147
    %149 = xla_tuple %v147, %v139, %v17
    %150 = xla_tuple %149
    %v151 = vsel %vm146, %v139, %v17
    %152 = xla_tuple %v151
    %s153 = scalar_lea.vmem [#allocation7], 16
    %v154 = vpack.c.bf16 0.0, %v151
    %s156 = ssub.s32 16, 1
    %157 = vst [vmem:[%s153] sm:%s156] %v154
    %s158 = scalar_lea.vmem %s2, 20
    %v159 = vld [vmem:[%s158] sm:$0xf]
    %v160 = vunpack.c.l.bf16 %v159
    %v161 = vunpack.c.h.bf16 %v159
    %v162 = vlaneseq
    %v163 = vshrl.u32 %v162, 7
    %v164 = vadd.s32 %v163, 8
    %vm165 = vcmp.lt.s32.totalorder %v164, 36
    %v166 = vsel %vm165, %v160, %v12
    %v167 = vlaneseq
    %v168 = vshrl.u32 %v167, 7
    %v170 = vadd.s32 %v168, 8
    %171 = xla_tuple %v170, %v10
    %172 = xla_tuple %171
    %vm173 = vcmp.lt.s32.totalorder %v170, %v10
    %v174 = vsel %vm173, 1, 0
    %175 = xla_tuple %v174
    %176 = xla_tuple %v174, %v166, %v17
    %177 = xla_tuple %176
    %v178 = vsel %vm173, %v166, %v17
    %179 = xla_tuple %v178
    %s180 = scalar_lea.vmem [#allocation7], 20
    %v181 = vpack.c.bf16 0.0, %v178
    %s183 = ssub.s32 16, 1
    %184 = vst [vmem:[%s180] sm:%s183] %v181
    %s185 = scalar_lea.vmem %s2, 24
    %v186 = vld [vmem:[%s185] sm:$0xf]
    %v187 = vunpack.c.l.bf16 %v186
    %v188 = vunpack.c.h.bf16 %v186
    %v189 = vlaneseq
    %v190 = vshrl.u32 %v189, 7
    %v191 = vadd.s32 %v190, 8
    %vm192 = vcmp.lt.s32.totalorder %v191, 36
    %v193 = vsel %vm192, %v187, %v12
    %v194 = vlaneseq
    %v195 = vshrl.u32 %v194, 7
    %v197 = vadd.s32 %v195, 8
    %198 = xla_tuple %v197, %v10
    %199 = xla_tuple %198
    %vm200 = vcmp.lt.s32.totalorder %v197, %v10
    %v201 = vsel %vm200, 1, 0
    %202 = xla_tuple %v201
    %203 = xla_tuple %v201, %v193, %v17
    %204 = xla_tuple %203
    %v205 = vsel %vm200, %v193, %v17
    %206 = xla_tuple %v205
    %s207 = scalar_lea.vmem [#allocation7], 24
    %v208 = vpack.c.bf16 0.0, %v205
    %s210 = ssub.s32 16, 1
    %211 = vst [vmem:[%s207] sm:%s210] %v208
    %s212 = scalar_lea.vmem %s2, 28
    %v213 = vld [vmem:[%s212] sm:$0xf]
    %v214 = vunpack.c.l.bf16 %v213
    %v215 = vunpack.c.h.bf16 %v213
    %v216 = vlaneseq
    %v217 = vshrl.u32 %v216, 7
    %v218 = vadd.s32 %v217, 8
    %vm219 = vcmp.lt.s32.totalorder %v218, 36
    %v220 = vsel %vm219, %v214, %v12
    %v221 = vlaneseq
    %v222 = vshrl.u32 %v221, 7
    %v224 = vadd.s32 %v222, 8
    %225 = xla_tuple %v224, %v10
    %226 = xla_tuple %225
    %vm227 = vcmp.lt.s32.totalorder %v224, %v10
    %v228 = vsel %vm227, 1, 0
    %229 = xla_tuple %v228
    %230 = xla_tuple %v228, %v220, %v17
    %231 = xla_tuple %230
    %v232 = vsel %vm227, %v220, %v17
    %233 = xla_tuple %v232
    %s234 = scalar_lea.vmem [#allocation7], 28
    %v235 = vpack.c.bf16 0.0, %v232
    %s237 = ssub.s32 16, 1
    %238 = vst [vmem:[%s234] sm:%s237] %v235
    %s239 = scalar_lea.vmem %s2, 32
    %v240 = vld [vmem:[%s239] sm:$0xf]
    %v241 = vunpack.c.l.bf16 %v240
    %v242 = vunpack.c.h.bf16 %v240
    %v243 = vlaneseq
    %v244 = vshrl.u32 %v243, 7
    %v245 = vadd.s32 %v244, 16
    %vm246 = vcmp.lt.s32.totalorder %v245, 36
    %v247 = vsel %vm246, %v241, %v12
    %v248 = vlaneseq
    %v249 = vshrl.u32 %v248, 7
    %v251 = vadd.s32 %v249, 16
    %252 = xla_tuple %v251, %v10
    %253 = xla_tuple %252
    %vm254 = vcmp.lt.s32.totalorder %v251, %v10
    %v255 = vsel %vm254, 1, 0
    %256 = xla_tuple %v255
    %257 = xla_tuple %v255, %v247, %v17
    %258 = xla_tuple %257
    %v259 = vsel %vm254, %v247, %v17
    %260 = xla_tuple %v259
    %s261 = scalar_lea.vmem [#allocation7], 32
    %v262 = vpack.c.bf16 0.0, %v259
    %s264 = ssub.s32 16, 1
    %265 = vst [vmem:[%s261] sm:%s264] %v262
    %s266 = scalar_lea.vmem %s2, 36
    %v267 = vld [vmem:[%s266] sm:$0xf]
    %v268 = vunpack.c.l.bf16 %v267
    %v269 = vunpack.c.h.bf16 %v267
    %v270 = vlaneseq
    %v271 = vshrl.u32 %v270, 7
    %v272 = vadd.s32 %v271, 16
    %vm273 = vcmp.lt.s32.totalorder %v272, 36
    %v274 = vsel %vm273, %v268, %v12
    %v275 = vlaneseq
    %v276 = vshrl.u32 %v275, 7
    %v278 = vadd.s32 %v276, 16
    %279 = xla_tuple %v278, %v10
    %280 = xla_tuple %279
    %vm281 = vcmp.lt.s32.totalorder %v278, %v10
    %v282 = vsel %vm281, 1, 0
    %283 = xla_tuple %v282
    %284 = xla_tuple %v282, %v274, %v17
    %285 = xla_tuple %284
    %v286 = vsel %vm281, %v274, %v17
    %287 = xla_tuple %v286
    %s288 = scalar_lea.vmem [#allocation7], 36
    %v289 = vpack.c.bf16 0.0, %v286
    %s291 = ssub.s32 16, 1
    %292 = vst [vmem:[%s288] sm:%s291] %v289
    %s293 = scalar_lea.vmem %s2, 40
    %v294 = vld [vmem:[%s293] sm:$0xf]
    %v295 = vunpack.c.l.bf16 %v294
    %v296 = vunpack.c.h.bf16 %v294
    %v297 = vlaneseq
    %v298 = vshrl.u32 %v297, 7
    %v299 = vadd.s32 %v298, 16
    %vm300 = vcmp.lt.s32.totalorder %v299, 36
    %v301 = vsel %vm300, %v295, %v12
    %v302 = vlaneseq
    %v303 = vshrl.u32 %v302, 7
    %v305 = vadd.s32 %v303, 16
    %306 = xla_tuple %v305, %v10
    %307 = xla_tuple %306
    %vm308 = vcmp.lt.s32.totalorder %v305, %v10
    %v309 = vsel %vm308, 1, 0
    %310 = xla_tuple %v309
    %311 = xla_tuple %v309, %v301, %v17
    %312 = xla_tuple %311
    %v313 = vsel %vm308, %v301, %v17
    %314 = xla_tuple %v313
    %s315 = scalar_lea.vmem [#allocation7], 40
    %v316 = vpack.c.bf16 0.0, %v313
    %s318 = ssub.s32 16, 1
    %319 = vst [vmem:[%s315] sm:%s318] %v316
    %s320 = scalar_lea.vmem %s2, 44
    %v321 = vld [vmem:[%s320] sm:$0xf]
    %v322 = vunpack.c.l.bf16 %v321
    %v323 = vunpack.c.h.bf16 %v321
    %v324 = vlaneseq
    %v325 = vshrl.u32 %v324, 7
    %v326 = vadd.s32 %v325, 16
    %vm327 = vcmp.lt.s32.totalorder %v326, 36
    %v328 = vsel %vm327, %v322, %v12
    %v329 = vlaneseq
    %v330 = vshrl.u32 %v329, 7
    %v332 = vadd.s32 %v330, 16
    %333 = xla_tuple %v332, %v10
    %334 = xla_tuple %333
    %vm335 = vcmp.lt.s32.totalorder %v332, %v10
    %v336 = vsel %vm335, 1, 0
    %337 = xla_tuple %v336
    %338 = xla_tuple %v336, %v328, %v17
    %339 = xla_tuple %338
    %v340 = vsel %vm335, %v328, %v17
    %341 = xla_tuple %v340
    %s342 = scalar_lea.vmem [#allocation7], 44
    %v343 = vpack.c.bf16 0.0, %v340
    %s345 = ssub.s32 16, 1
    %346 = vst [vmem:[%s342] sm:%s345] %v343
    %s347 = scalar_lea.vmem %s2, 48
    %s349 = sor.u32 255, 127
    %s350 = sand.u32 %s349, 85
    %s351 = sshrl.u32 %s350, 1
    %s352 = sor.u32 %s350, %s351
    %s353 = sand.u32 51, %s352
    %s354 = sshrl.u32 %s353, 2
    %s355 = sor.u32 %s353, %s354
    %s356 = sand.u32 15, %s355
    %v357 = vld [vmem:[%s347] sm:%s356]
    %v358 = vunpack.c.l.bf16 %v357
    %v359 = vunpack.c.h.bf16 %v357
    %v360 = vlaneseq
    %v361 = vshrl.u32 %v360, 7
    %v362 = vadd.s32 %v361, 24
    %vm363 = vcmp.lt.s32.totalorder %v362, 36
    %v364 = vsel %vm363, %v358, %v12
    %v365 = vlaneseq
    %v366 = vshrl.u32 %v365, 7
    %v368 = vadd.s32 %v366, 24
    %369 = xla_tuple %v368, %v10
    %370 = xla_tuple %369
    %vm371 = vcmp.lt.s32.totalorder %v368, %v10
    %v372 = vsel %vm371, 1, 0
    %373 = xla_tuple %v372
    %374 = xla_tuple %v372, %v364, %v17
    %375 = xla_tuple %374
    %v376 = vsel %vm371, %v364, %v17
    %377 = xla_tuple %v376
    %s378 = scalar_lea.vmem [#allocation7], 48
    %v379 = vpack.c.bf16 0.0, %v376
    %s381 = ssub.s32 16, 1
    %382 = vst [vmem:[%s378] sm:%s381] %v379
    %s383 = scalar_lea.vmem %s2, 52
    %s385 = sor.u32 255, 127
    %s386 = sand.u32 %s385, 85
    %s387 = sshrl.u32 %s386, 1
    %s388 = sor.u32 %s386, %s387
    %s389 = sand.u32 51, %s388
    %s390 = sshrl.u32 %s389, 2
    %s391 = sor.u32 %s389, %s390
    %s392 = sand.u32 15, %s391
    %v393 = vld [vmem:[%s383] sm:%s392]
    %v394 = vunpack.c.l.bf16 %v393
    %v395 = vunpack.c.h.bf16 %v393
    %v396 = vlaneseq
    %v397 = vshrl.u32 %v396, 7
    %v398 = vadd.s32 %v397, 24
    %vm399 = vcmp.lt.s32.totalorder %v398, 36
    %v400 = vsel %vm399, %v394, %v12
    %v401 = vlaneseq
    %v402 = vshrl.u32 %v401, 7
    %v404 = vadd.s32 %v402, 24
    %405 = xla_tuple %v404, %v10
    %406 = xla_tuple %405
    %vm407 = vcmp.lt.s32.totalorder %v404, %v10
    %v408 = vsel %vm407, 1, 0
    %409 = xla_tuple %v408
    %410 = xla_tuple %v408, %v400, %v17
    %411 = xla_tuple %410
    %v412 = vsel %vm407, %v400, %v17
    %413 = xla_tuple %v412
    %s414 = scalar_lea.vmem [#allocation7], 52
    %v415 = vpack.c.bf16 0.0, %v412
    %s417 = ssub.s32 16, 1
    %418 = vst [vmem:[%s414] sm:%s417] %v415
    %s419 = scalar_lea.vmem %s2, 56
    %s421 = sor.u32 255, 127
    %s422 = sand.u32 %s421, 85
    %s423 = sshrl.u32 %s422, 1
    %s424 = sor.u32 %s422, %s423
    %s425 = sand.u32 51, %s424
    %s426 = sshrl.u32 %s425, 2
    %s427 = sor.u32 %s425, %s426
    %s428 = sand.u32 15, %s427
    %v429 = vld [vmem:[%s419] sm:%s428]
    %v430 = vunpack.c.l.bf16 %v429
    %v431 = vunpack.c.h.bf16 %v429
    %v432 = vlaneseq
    %v433 = vshrl.u32 %v432, 7
    %v434 = vadd.s32 %v433, 24
    %vm435 = vcmp.lt.s32.totalorder %v434, 36
    %v436 = vsel %vm435, %v430, %v12
    %v437 = vlaneseq
    %v438 = vshrl.u32 %v437, 7
    %v440 = vadd.s32 %v438, 24
    %441 = xla_tuple %v440, %v10
    %442 = xla_tuple %441
    %vm443 = vcmp.lt.s32.totalorder %v440, %v10
    %v444 = vsel %vm443, 1, 0
    %445 = xla_tuple %v444
    %446 = xla_tuple %v444, %v436, %v17
    %447 = xla_tuple %446
    %v448 = vsel %vm443, %v436, %v17
    %449 = xla_tuple %v448
    %s450 = scalar_lea.vmem [#allocation7], 56
    %v451 = vpack.c.bf16 0.0, %v448
    %s453 = ssub.s32 16, 1
    %454 = vst [vmem:[%s450] sm:%s453] %v451
    %s455 = scalar_lea.vmem %s2, 60
    %s457 = sor.u32 255, 127
    %s458 = sand.u32 %s457, 85
    %s459 = sshrl.u32 %s458, 1
    %s460 = sor.u32 %s458, %s459
    %s461 = sand.u32 51, %s460
    %s462 = sshrl.u32 %s461, 2
    %s463 = sor.u32 %s461, %s462
    %s464 = sand.u32 15, %s463
    %v465 = vld [vmem:[%s455] sm:%s464]
    %v466 = vunpack.c.l.bf16 %v465
    %v467 = vunpack.c.h.bf16 %v465
    %v468 = vlaneseq
    %v469 = vshrl.u32 %v468, 7
    %v470 = vadd.s32 %v469, 24
    %vm471 = vcmp.lt.s32.totalorder %v470, 36
    %v472 = vsel %vm471, %v466, %v12
    %v473 = vlaneseq
    %v474 = vshrl.u32 %v473, 7
    %v476 = vadd.s32 %v474, 24
    %477 = xla_tuple %v476, %v10
    %478 = xla_tuple %477
    %vm479 = vcmp.lt.s32.totalorder %v476, %v10
    %v480 = vsel %vm479, 1, 0
    %481 = xla_tuple %v480
    %482 = xla_tuple %v480, %v472, %v17
    %483 = xla_tuple %482
    %v484 = vsel %vm479, %v472, %v17
    %485 = xla_tuple %v484
    %s486 = scalar_lea.vmem [#allocation7], 60
    %v487 = vpack.c.bf16 0.0, %v484
    %s489 = ssub.s32 16, 1
    %490 = vst [vmem:[%s486] sm:%s489] %v487
    %s491 = scalar_lea.vmem %s2, 64
    %s493 = sor.u32 255, 127
    %s494 = sand.u32 %s493, 85
    %s495 = sshrl.u32 %s494, 1
    %s496 = sor.u32 %s494, %s495
    %s497 = sand.u32 51, %s496
    %s498 = sshrl.u32 %s497, 2
    %s499 = sor.u32 %s497, %s498
    %s500 = sand.u32 15, %s499
    %v501 = vld [vmem:[%s491] sm:%s500]
    %v502 = vunpack.c.l.bf16 %v501
    %v503 = vunpack.c.h.bf16 %v501
    %v504 = vlaneseq
    %v505 = vshrl.u32 %v504, 7
    %v506 = vadd.s32 %v505, 32
    %vm507 = vcmp.lt.s32.totalorder %v506, 36
    %v508 = vsel %vm507, %v502, %v12
    %v509 = vlaneseq
    %v510 = vshrl.u32 %v509, 7
    %v512 = vadd.s32 %v510, 32
    %513 = xla_tuple %v512, %v10
    %514 = xla_tuple %513
    %vm515 = vcmp.lt.s32.totalorder %v512, %v10
    %v516 = vsel %vm515, 1, 0
    %517 = xla_tuple %v516
    %518 = xla_tuple %v516, %v508, %v17
    %519 = xla_tuple %518
    %v520 = vsel %vm515, %v508, %v17
    %521 = xla_tuple %v520
    %s522 = scalar_lea.vmem [#allocation7], 64
    %v523 = vpack.c.bf16 0.0, %v520
    %s525 = ssub.s32 16, 1
    %526 = vst [vmem:[%s522] sm:%s525] %v523
    %s527 = scalar_lea.vmem %s2, 68
    %s529 = sor.u32 255, 127
    %s530 = sand.u32 %s529, 85
    %s531 = sshrl.u32 %s530, 1
    %s532 = sor.u32 %s530, %s531
    %s533 = sand.u32 51, %s532
    %s534 = sshrl.u32 %s533, 2
    %s535 = sor.u32 %s533, %s534
    %s536 = sand.u32 15, %s535
    %v537 = vld [vmem:[%s527] sm:%s536]
    %v538 = vunpack.c.l.bf16 %v537
    %v539 = vunpack.c.h.bf16 %v537
    %v540 = vlaneseq
    %v541 = vshrl.u32 %v540, 7
    %v542 = vadd.s32 %v541, 32
    %vm543 = vcmp.lt.s32.totalorder %v542, 36
    %v544 = vsel %vm543, %v538, %v12
    %v545 = vlaneseq
    %v546 = vshrl.u32 %v545, 7
    %v548 = vadd.s32 %v546, 32
    %549 = xla_tuple %v548, %v10
    %550 = xla_tuple %549
    %vm551 = vcmp.lt.s32.totalorder %v548, %v10
    %v552 = vsel %vm551, 1, 0
    %553 = xla_tuple %v552
    %554 = xla_tuple %v552, %v544, %v17
    %555 = xla_tuple %554
    %v556 = vsel %vm551, %v544, %v17
    %557 = xla_tuple %v556
    %s558 = scalar_lea.vmem [#allocation7], 68
    %v559 = vpack.c.bf16 0.0, %v556
    %s561 = ssub.s32 16, 1
    %562 = vst [vmem:[%s558] sm:%s561] %v559
    %s563 = scalar_lea.vmem %s2, 72
    %s565 = sor.u32 255, 127
    %s566 = sand.u32 %s565, 85
    %s567 = sshrl.u32 %s566, 1
    %s568 = sor.u32 %s566, %s567
    %s569 = sand.u32 51, %s568
    %s570 = sshrl.u32 %s569, 2
    %s571 = sor.u32 %s569, %s570
    %s572 = sand.u32 15, %s571
    %v573 = vld [vmem:[%s563] sm:%s572]
    %v574 = vunpack.c.l.bf16 %v573
    %v575 = vunpack.c.h.bf16 %v573
    %v576 = vlaneseq
    %v577 = vshrl.u32 %v576, 7
    %v578 = vadd.s32 %v577, 32
    %vm579 = vcmp.lt.s32.totalorder %v578, 36
    %v580 = vsel %vm579, %v574, %v12
    %v581 = vlaneseq
    %v582 = vshrl.u32 %v581, 7
    %v584 = vadd.s32 %v582, 32
    %585 = xla_tuple %v584, %v10
    %586 = xla_tuple %585
    %vm587 = vcmp.lt.s32.totalorder %v584, %v10
    %v588 = vsel %vm587, 1, 0
    %589 = xla_tuple %v588
    %590 = xla_tuple %v588, %v580, %v17
    %591 = xla_tuple %590
    %v592 = vsel %vm587, %v580, %v17
    %593 = xla_tuple %v592
    %s594 = scalar_lea.vmem [#allocation7], 72
    %v595 = vpack.c.bf16 0.0, %v592
    %s597 = ssub.s32 16, 1
    %598 = vst [vmem:[%s594] sm:%s597] %v595
    %s599 = scalar_lea.vmem %s2, 76
    %s601 = sor.u32 255, 127
    %s602 = sand.u32 %s601, 85
    %s603 = sshrl.u32 %s602, 1
    %s604 = sor.u32 %s602, %s603
    %s605 = sand.u32 51, %s604
    %s606 = sshrl.u32 %s605, 2
    %s607 = sor.u32 %s605, %s606
    %s608 = sand.u32 15, %s607
    %v609 = vld [vmem:[%s599] sm:%s608]
    %v610 = vunpack.c.l.bf16 %v609
    %v611 = vunpack.c.h.bf16 %v609
    %v612 = vlaneseq
    %v613 = vshrl.u32 %v612, 7
    %v614 = vadd.s32 %v613, 32
    %vm615 = vcmp.lt.s32.totalorder %v614, 36
    %v616 = vsel %vm615, %v610, %v12
    %v617 = vlaneseq
    %v618 = vshrl.u32 %v617, 7
    %v620 = vadd.s32 %v618, 32
    %621 = xla_tuple %v620, %v10
    %622 = xla_tuple %621
    %vm623 = vcmp.lt.s32.totalorder %v620, %v10
    %v624 = vsel %vm623, 1, 0
    %625 = xla_tuple %v624
    %626 = xla_tuple %v624, %v616, %v17
    %627 = xla_tuple %626
    %v628 = vsel %vm623, %v616, %v17
    %629 = xla_tuple %v628
    %s630 = scalar_lea.vmem [#allocation7], 76
    %v631 = vpack.c.bf16 0.0, %v628
    %s633 = ssub.s32 16, 1
    %634 = vst [vmem:[%s630] sm:%s633] %v631
    %v635 = vlaneseq
    %v636 = vshrl.u32 %v635, 7
    %v638 = vadd.s32 %v636, 40
    %639 = xla_tuple %v638, %v10
    %640 = xla_tuple %639
    %vm641 = vcmp.lt.s32.totalorder %v638, %v10
    %v642 = vsel %vm641, 1, 0
    %643 = xla_tuple %v642
    %644 = xla_tuple %v642, %v12, %v17
    %645 = xla_tuple %644
    %v646 = vsel %vm641, %v12, %v17
    %647 = xla_tuple %v646
    %s648 = scalar_lea.vmem [#allocation7], 80
    %v649 = vpack.c.bf16 0.0, %v646
    %s651 = ssub.s32 16, 1
    %652 = vst [vmem:[%s648] sm:%s651] %v649
    %v653 = vlaneseq
    %v654 = vshrl.u32 %v653, 7
    %v656 = vadd.s32 %v654, 40
    %657 = xla_tuple %v656, %v10
    %658 = xla_tuple %657
    %vm659 = vcmp.lt.s32.totalorder %v656, %v10
    %v660 = vsel %vm659, 1, 0
    %661 = xla_tuple %v660
    %662 = xla_tuple %v660, %v12, %v17
    %663 = xla_tuple %662
    %v664 = vsel %vm659, %v12, %v17
    %665 = xla_tuple %v664
    %s666 = scalar_lea.vmem [#allocation7], 84
    %v667 = vpack.c.bf16 0.0, %v664
    %s669 = ssub.s32 16, 1
    %670 = vst [vmem:[%s666] sm:%s669] %v667
    %v671 = vlaneseq
    %v672 = vshrl.u32 %v671, 7
    %v674 = vadd.s32 %v672, 40
    %675 = xla_tuple %v674, %v10
    %676 = xla_tuple %675
    %vm677 = vcmp.lt.s32.totalorder %v674, %v10
    %v678 = vsel %vm677, 1, 0
    %679 = xla_tuple %v678
    %680 = xla_tuple %v678, %v12, %v17
    %681 = xla_tuple %680
    %v682 = vsel %vm677, %v12, %v17
    %683 = xla_tuple %v682
    %s684 = scalar_lea.vmem [#allocation7], 88
    %v685 = vpack.c.bf16 0.0, %v682
    %s687 = ssub.s32 16, 1
    %688 = vst [vmem:[%s684] sm:%s687] %v685
    %v689 = vlaneseq
    %v690 = vshrl.u32 %v689, 7
    %v692 = vadd.s32 %v690, 40
    %693 = xla_tuple %v692, %v10
    %694 = xla_tuple %693
    %vm695 = vcmp.lt.s32.totalorder %v692, %v10
    %v696 = vsel %vm695, 1, 0
    %697 = xla_tuple %v696
    %698 = xla_tuple %v696, %v12, %v17
    %699 = xla_tuple %698
    %v700 = vsel %vm695, %v12, %v17
    %701 = xla_tuple %v700
    %s702 = scalar_lea.vmem [#allocation7], 92
    %v703 = vpack.c.bf16 0.0, %v700
    %s705 = ssub.s32 16, 1
    %706 = vst [vmem:[%s702] sm:%s705] %v703
    %v708 = vld [vmem:[%s0] sm:$0xf]
    %v709 = vld [vmem:[#allocation7] sm:$0xff]
    %v710 = vld [vmem:[#allocation7 + $0x8] sm:$0xff]
    %v711 = vld [vmem:[#allocation7 + $0x10] sm:$0xff]
    %v712 = vld [vmem:[#allocation7 + $0x18] sm:$0xff]
    %v713 = vld [vmem:[#allocation7 + $0x20] sm:$0xff]
    %v714 = vld [vmem:[#allocation7 + $0x28] sm:$0xff]
    %v715 = vld [vmem:[#allocation7 + $0x30] sm:$0xff]
    %v716 = vld [vmem:[#allocation7 + $0x38] sm:$0xff]
    %v717 = vld [vmem:[#allocation7 + $0x40] sm:$0xff]
    %v718 = vld [vmem:[#allocation7 + $0x48] sm:$0xff]
    %v719 = vld [vmem:[#allocation7 + $0x50] sm:$0xff]
    %v720 = vld [vmem:[#allocation7 + $0x58] sm:$0xff]
    %v733 = vunpack.c.l.b16 %v709
    %v734 = vunpack.c.h.b16 %v709
    %v735 = vunpack.c.l.b16 %v710
    %v736 = vunpack.c.h.b16 %v710
    %v737 = vunpack.c.l.b16 %v711
    %v738 = vunpack.c.h.b16 %v711
    %v739 = vunpack.c.l.b16 %v712
    %v740 = vunpack.c.h.b16 %v712
    %v741 = vunpack.c.l.b16 %v713
    %v742 = vunpack.c.h.b16 %v713
    %v743 = vunpack.c.l.b16 %v714
    %v744 = vunpack.c.h.b16 %v714
    %v745 = vunpack.c.l.b16 %v715
    %v746 = vunpack.c.h.b16 %v715
    %v747 = vunpack.c.l.b16 %v716
    %v748 = vunpack.c.h.b16 %v716
    %v749 = vunpack.c.l.b16 %v717
    %v750 = vunpack.c.h.b16 %v717
    %v751 = vunpack.c.l.b16 %v718
    %v752 = vunpack.c.h.b16 %v718
    %v753 = vunpack.c.l.b16 %v719
    %v754 = vunpack.c.h.b16 %v719
    %v755 = vunpack.c.l.b16 %v720
    %v756 = vunpack.c.h.b16 %v720
    %v757 = vpack.c.b16 %v737, %v733
    %v758 = vpack.c.b16 %v738, %v734
    %v759 = vpack.c.b16 %v739, %v735
    %v760 = vpack.c.b16 %v740, %v736
    %v761 = vpack.c.b16 %v745, %v741
    %v762 = vpack.c.b16 %v746, %v742
    %v763 = vpack.c.b16 %v747, %v743
    %v764 = vpack.c.b16 %v748, %v744
    %v765 = vpack.c.b16 %v753, %v749
    %v766 = vpack.c.b16 %v754, %v750
    %v767 = vpack.c.b16 %v755, %v751
    %v768 = vpack.c.b16 %v756, %v752
    %vm781 = vcmask 392192
    %v783 = vsel %vm781, %v708, 0
    %785 = vmatpush.bf16.msra.mxu0 0
    %786 = vmatpush.bf16.msra.mxu0 0
    %787 = vmatpush.bf16.msra.mxu0 0
    %788 = vmatpush.bf16.msra.mxu0 0
    %789 = vmatpush.bf16.msra.mxu0 0
    %790 = vmatpush.bf16.msra.mxu0 %v765
    %791 = vmatpush.bf16.msra.mxu0 %v761
    %792 = vmatpush.bf16.msra.mxu0 %v757
    %793 = vmatmul.bf16.gmra.mxu0 %v783
    %v794 = vpop.f32.mrf.mxu0
    %v795 = vadd.f32 0.0, %v794
    %v796 = vpop.f32.mrf.mxu0
    %797 = vdwg.mxu0
    %798 = vmatpush.bf16.msra.mxu0 0
    %799 = vmatpush.bf16.msra.mxu0 0
    %800 = vmatpush.bf16.msra.mxu0 0
    %801 = vmatpush.bf16.msra.mxu0 0
    %802 = vmatpush.bf16.msra.mxu0 0
    %803 = vmatpush.bf16.msra.mxu0 %v766
    %804 = vmatpush.bf16.msra.mxu0 %v762
    %805 = vmatpush.bf16.msra.mxu0 %v758
    %806 = vmatmul.bf16.gmra.mxu0 %v783
    %v807 = vpop.f32.mrf.mxu0
    %v808 = vadd.f32 0.0, %v807
    %v809 = vpop.f32.mrf.mxu0
    %810 = vdwg.mxu0
    %811 = vmatpush.bf16.msra.mxu0 0
    %812 = vmatpush.bf16.msra.mxu0 0
    %813 = vmatpush.bf16.msra.mxu0 0
    %814 = vmatpush.bf16.msra.mxu0 0
    %815 = vmatpush.bf16.msra.mxu0 0
    %816 = vmatpush.bf16.msra.mxu0 %v767
    %817 = vmatpush.bf16.msra.mxu0 %v763
    %818 = vmatpush.bf16.msra.mxu0 %v759
    %819 = vmatmul.bf16.gmra.mxu0 %v783
    %v820 = vpop.f32.mrf.mxu0
    %v821 = vadd.f32 0.0, %v820
    %v822 = vpop.f32.mrf.mxu0
    %823 = vdwg.mxu0
    %824 = vmatpush.bf16.msra.mxu0 0
    %825 = vmatpush.bf16.msra.mxu0 0
    %826 = vmatpush.bf16.msra.mxu0 0
    %827 = vmatpush.bf16.msra.mxu0 0
    %828 = vmatpush.bf16.msra.mxu0 0
    %829 = vmatpush.bf16.msra.mxu0 %v768
    %830 = vmatpush.bf16.msra.mxu0 %v764
    %831 = vmatpush.bf16.msra.mxu0 %v760
    %832 = vmatmul.bf16.gmra.mxu0 %v783
    %v833 = vpop.f32.mrf.mxu0
    %v834 = vadd.f32 0.0, %v833
    %v835 = vpop.f32.mrf.mxu0
    %836 = vdwg.mxu0
    %v837 = vmax.f32 %v795, 0.0
    %v838 = vmax.f32 %v808, 0.0
    %v839 = vmax.f32 %v821, 0.0
    %v840 = vmax.f32 %v834, 0.0
    %841 = vst [vmem:[%s5] sm:$0xff] %v837
    %842 = vst [vmem:[%s5 + $0x8] sm:$0xff] %v838
    %843 = vst [vmem:[%s5 + $0x10] sm:$0xff] %v839
    %844 = vst [vmem:[%s5 + $0x18] sm:$0xff] %v840
    // Predicated region
    $region10: #{down_conv_forward.2} parent=1 // pred_check
      _
    $region11: #{down_conv_forward.2} parent=1 // pred_check_branch
      %846 = sbr.rel (0) target = $region13
    $region12: #{down_conv_forward.2} parent=1 // pred_region
      _
    $region13: #{down_conv_forward.2} parent=1 // pred_fallthru
      _
    // Predicated region
    $region14: #{down_conv_forward.2} parent=1 // pred_check
      _
    $region15: #{down_conv_forward.2} parent=1 // pred_check_branch
      %848 = sbr.rel (0) target = $region17
    $region16: #{down_conv_forward.2} parent=1 // pred_region
      _
    $region17: #{down_conv_forward.2} parent=1 // pred_fallthru
      _

</llo_original>
